<compile_context>
chip_gen: v7x
topology: tpu7x:2x2x1
jax: 0.10.0
libtpu: 0.0.40
codegen_flags: <defaults>
</compile_context>

<pallas_src>
import functools

import jax
import jax.numpy as jnp
from jax.experimental import pallas as pl
from jax.experimental.pallas import tpu as pltpu


_SQRT_HALF = 0.7071067811865476


def _gelu(x, approximate):
    if approximate:
        # tanh formulation -> EUP slot, overlaps with MXU work.
        return jax.nn.gelu(x, approximate=True)
    # PyTorch nn.GELU() default: exact erf formulation.
    return x * 0.5 * (1.0 + jax.lax.erf(x * _SQRT_HALF))


def _round_up(x, m):
    return ((x + m - 1) // m) * m


def _cdiv(a, b):
    return -(-a // b)


def _pick_h_chunk(H, target):
    """Largest MXU-friendly chunk (multiple of 128, <= target) dividing H."""
    if H <= target:
        return H
    for c in range(min(target, H) // 128, 0, -1):
        if H % (c * 128) == 0:
            return c * 128
    return H  # no 128-multiple divisor -> single chunk


@functools.lru_cache(maxsize=1)
def _single_buffer_supported():
    """Capability probe: can a resident block be single-buffered (Buffered(1))?"""
    if not hasattr(pl, "Buffered"):
        return False
    try:
        def k(a_ref, o_ref):
            o_ref[...] = a_ref[...] + 1.0
        f = pl.pallas_call(
            k,
            out_shape=jax.ShapeDtypeStruct((8, 128), jnp.float32),
            grid_spec=pltpu.PrefetchScalarGridSpec(
                num_scalar_prefetch=0,
                grid=(1,),
                in_specs=[pl.BlockSpec((8, 128), lambda i: (0, 0),
                                       pipeline_mode=pl.Buffered(1))],
                out_specs=pl.BlockSpec((8, 128), lambda i: (0, 0)),
            ))
        jax.block_until_ready(f(jnp.zeros((8, 128), jnp.float32)))
        return True
    except Exception:
        return False


@functools.lru_cache(maxsize=1)
def _vmem_cap_bytes():
    """Per-generation scoped-VMEM ceiling (leave headroom below physical)."""
    try:
        cap = int(getattr(pltpu.get_tpu_info(), "vmem_capacity_bytes", 0) or 0)
        if cap > 0:
            return max(cap - (16 << 20), (cap * 3) // 4)
    except Exception:
        pass
    return 56 << 20  # conservative default: fits v7x's 64 MiB per-core VMEM


def mlp_kernel(x_ref, w1_ref, b1_ref, w2_ref, b2_ref, o_ref, acc_ref,
               *, h_chunk, n_chunks, gelu_approx):
    # x_ref:  (tm, C_in)  activation's stored dtype (cast in-kernel)
    # w1_ref: (C_in, H)   b1_ref: (1, H)
    # w2_ref: (H, C_out)  b2_ref: (1, C_out)
    # o_ref:  (tm, C_out) acc_ref: (tm, C_out) f32 scratch
    x = x_ref[...].astype(w1_ref.dtype)  # free VPU cast -> MXU-native input

    def fc_chunk(w1c, b1c, w2c):
        h = jnp.dot(x, w1c, preferred_element_type=jnp.float32)     # fc1 chunk (MXU)
        h = h + b1c.astype(jnp.float32)
        h = _gelu(h, gelu_approx)                                    # VPU / EUP
        # dropout(p=0.0) is the identity -> nothing to do
        return jnp.dot(h.astype(w2c.dtype), w2c,                     # fc2 partial (MXU)
                       preferred_element_type=jnp.float32)

    if n_chunks == 1:
        acc = fc_chunk(w1_ref[...], b1_ref[...], w2_ref[...])
    else:
        # Statically-unrolled chunk loop (== fori_loop(unroll=True) but with
        # static, zero-cost ref slices).  Each chunk's f32 intermediate is
        # (tm, h_chunk) and dies right after its accumulate, so MXU work of
        # the next chunk overlaps the GELU of the current one.
        acc_ref[...] = jnp.zeros_like(acc_ref)
        for c in range(n_chunks):
            lo, hi = c * h_chunk, (c + 1) * h_chunk
            acc_ref[...] += fc_chunk(w1_ref[:, lo:hi], b1_ref[:, lo:hi],
                                     w2_ref[lo:hi, :])
        acc = acc_ref[...]

    o_ref[...] = (acc + b2_ref[...].astype(jnp.float32)).astype(o_ref.dtype)


def mlp_pallas(x, w1, b1, w2, b2, *, tm=512, h_chunk=512, gelu_approx=False):
    """ViT MLP forward: fc2(GELU(fc1(x))), dropout p=0.0.

    x: (B, N, C_in); w1: (C_in, H); b1: (H,); w2: (H, C_out); b2: (C_out,).
    Matmul inputs run in the weight dtype (store/pass bf16 weights for mixed
    precision); accumulation, bias adds and GELU are f32.
    """
    B, N, C_in = x.shape
    H = w1.shape[1]
    C_out = w2.shape[1]
    M = B * N

    if jnp.dtype(w1.dtype).itemsize < 2 or jnp.dtype(w2.dtype).itemsize < 2:
        raise ValueError("int8/fp8 weights need explicit scaling and are not "
                         "supported by this kernel.")
    assert w1.shape == (C_in, H) and w2.shape == (H, C_out)
    assert b1.shape[-1] == H and b2.shape[-1] == C_out

    out_dtype = x.dtype
    x_itemsize = jnp.dtype(x.dtype).itemsize
    w_itemsize = jnp.dtype(w1.dtype).itemsize
    out_itemsize = jnp.dtype(out_dtype).itemsize

    # No wrapper-side casts / pads of x (saves HBM round trips): the kernel
    # casts the (tm, C_in) tile in VMEM; a ragged last block is masked by
    # Pallas partial-block handling.
    x2 = x.reshape(M, C_in)
    b1_2 = b1.reshape(1, H)
    b2_2 = b2.reshape(1, C_out)

    # Token tile: dtype sublane alignment; split small problems in two so a
    # megacore / both v7x TensorCores get work.
    row_align = {4: 8, 2: 16, 1: 32}.get(min(x_itemsize, out_itemsize), 8)
    tm = int(tm)
    if tm >= M:
        tm = _cdiv(M, 2) if M > row_align else M
    tm = max(row_align, _round_up(tm, row_align))
    grid = (_cdiv(M, tm),)

    # Hidden-dim chunking.
    hc = _pick_h_chunk(H, int(h_chunk))
    n_chunks = H // hc

    # Weights resident in VMEM; single-buffered when supported.
    wkw = dict(pipeline_mode=pl.Buffered(1)) if _single_buffer_supported() else {}
    n_wbuf = 1 if wkw else 2

    weight_bytes = ((C_in * H + H * C_out) * w_itemsize
                    + H * jnp.dtype(b1.dtype).itemsize
                    + C_out * jnp.dtype(b2.dtype).itemsize)
    vmem_needed = (
        2 * tm * C_in * x_itemsize          # double-buffered x tiles
        + 2 * tm * C_out * out_itemsize     # double-buffered out tiles
        + n_wbuf * weight_bytes             # resident weights + biases
        + tm * C_out * 4                    # f32 accumulator scratch
        + tm * hc * (4 + w_itemsize)        # chunked GELU intermediate + cast copy
        + tm * C_in * w_itemsize            # in-kernel x cast copy
        + (4 << 20))                        # headroom
    vmem_limit = int(min(max(vmem_needed, 16 << 20), _vmem_cap_bytes()))

    flops = 2 * M * C_in * H + 2 * M * H * C_out
    bytes_accessed = (M * C_in * x_itemsize + weight_bytes
                      + M * C_out * out_itemsize)
    cost = pl.CostEstimate(flops=flops, transcendentals=M * H,
                           bytes_accessed=bytes_accessed)

    kernel = functools.partial(mlp_kernel, h_chunk=hc, n_chunks=n_chunks,
                               gelu_approx=gelu_approx)

    out2 = pl.pallas_call(
        kernel,
        out_shape=jax.ShapeDtypeStruct((M, C_out), out_dtype),
        grid_spec=pltpu.PrefetchScalarGridSpec(
            num_scalar_prefetch=0,
            grid=grid,
            in_specs=[
                pl.BlockSpec((tm, C_in), lambda i: (i, 0)),         # x tile
                pl.BlockSpec((C_in, H), lambda i: (0, 0), **wkw),   # w1 (resident)
                pl.BlockSpec((1, H), lambda i: (0, 0), **wkw),      # b1
                pl.BlockSpec((H, C_out), lambda i: (0, 0), **wkw),  # w2 (resident)
                pl.BlockSpec((1, C_out), lambda i: (0, 0), **wkw),  # b2
            ],
            out_specs=pl.BlockSpec((tm, C_out), lambda i: (i, 0)),
            scratch_shapes=[pltpu.VMEM((tm, C_out), jnp.float32)],
        ),
        compiler_params=pltpu.CompilerParams(
            dimension_semantics=("parallel",),
            vmem_limit_bytes=vmem_limit),
        cost_estimate=cost,
    )(x2, w1, b1_2, w2, b2_2)

    return out2.reshape(B, N, C_out)
    # TODO(synk): for hidden dims where even bf16 weights do not fit per-core
    # VMEM (v7x, 64 MiB), add a second grid axis over H that streams weight
    # slabs from HBM into the same f32 accumulator instead of full residency.


def mlp_reference(x, w1, b1, w2, b2, gelu_approx=False):
    h = (jnp.dot(x.astype(jnp.float32), w1.astype(jnp.float32))
         + b1.astype(jnp.float32))
    h = _gelu(h, gelu_approx)
    y = jnp.dot(h, w2.astype(jnp.float32)) + b2.astype(jnp.float32)
    return y.astype(x.dtype)


if __name__ == "__main__":
    # Small deterministic setup consistent with Mlp(in_features=32, hidden=64).
    B, N = 2, 8
    in_features, hidden_features = 32, 64
    out_features = in_features

    key = jax.random.PRNGKey(0)
    kx, kw1, kb1, kw2, kb2 = jax.random.split(key, 5)

    x = jax.random.normal(kx, (B, N, in_features), dtype=jnp.float32)
    # Parameters stored as (in, out): x @ W == PyTorch x @ weight.T.
    w1 = jax.random.normal(kw1, (in_features, hidden_features), jnp.float32) * 0.02
    b1 = jax.random.normal(kb1, (hidden_features,), jnp.float32) * 0.02
    w2 = jax.random.normal(kw2, (hidden_features, out_features), jnp.float32) * 0.02
    b2 = jax.random.normal(kb2, (out_features,), jnp.float32) * 0.02

    ref = mlp_reference(x, w1, b1, w2, b2)

    # 1) f32, exact-erf GELU (parity with PyTorch nn.GELU() default).
    out = jax.block_until_ready(mlp_pallas(x, w1, b1, w2, b2))
    assert out.shape == (B, N, out_features)
    assert jnp.allclose(out, ref, atol=1e-5, rtol=1e-5), "f32 mismatch"

    # 2) Ragged token count (M not a multiple of the token tile).
    x_odd = x[:, :7, :]
    out_odd = jax.block_until_ready(mlp_pallas(x_odd, w1, b1, w2, b2))
    ref_odd = mlp_reference(x_odd, w1, b1, w2, b2)
    assert out_odd.shape == (B, 7, out_features)
    assert jnp.allclose(out_odd, ref_odd, atol=1e-5, rtol=1e-5), "ragged mismatch"

    # 3) Mixed precision: bf16 weights (x stays f32, cast in-kernel; f32 accum).
    out_bf16 = jax.block_until_ready(
        mlp_pallas(x, w1.astype(jnp.bfloat16), b1, w2.astype(jnp.bfloat16), b2))
    assert out_bf16.shape == (B, N, out_features)
    assert jnp.allclose(out_bf16, ref, atol=5e-2, rtol=5e-2), "bf16 mismatch"

    # 4) Hidden-dim chunked path (n_chunks > 1) with tanh-approx GELU.
    H2 = 256
    kw3, kb3, kw4, kb4 = jax.random.split(jax.random.PRNGKey(1), 4)
    w1b = jax.random.normal(kw3, (in_features, H2), jnp.float32) * 0.02
    b1b = jax.random.normal(kb3, (H2,), jnp.float32) * 0.02
    w2b = jax.random.normal(kw4, (H2, out_features), jnp.float32) * 0.02
    b2b = jax.random.normal(kb4, (out_features,), jnp.float32) * 0.02
    out_ck = jax.block_until_ready(
        mlp_pallas(x, w1b, b1b, w2b, b2b, h_chunk=128, gelu_approx=True))
    ref_ck = mlp_reference(x, w1b, b1b, w2b, b2b, gelu_approx=True)
    assert jnp.allclose(out_ck, ref_ck, atol=1e-5, rtol=1e-4), "chunked mismatch"

    print("KERNEL_OK")
</pallas_src>

<mosaic_0001>
module attributes {stable_mosaic.version = 11 : i64} {
  func.func @k(%arg0: i32, %arg1: memref<8x128xf32, #tpu.memory_space<vmem>>, %arg2: memref<8x128xf32, #tpu.memory_space<vmem>>) attributes {dimension_semantics = [#tpu.dimension_semantics<arbitrary>], iteration_bounds = array<i64: 1>, scalar_prefetch = 0 : i64, scratch_operands = 0 : i64, tpu.core_type = #tpu.core_type<tc>, window_params = [{pipeline_mode = #tpu.pipeline_mode<synchronous>, transform_indices = @transform_0, window_bounds = array<i64: 8, 128>}, {pipeline_mode = #tpu.pipeline_mode<synchronous>, transform_indices = @transform_1, window_bounds = array<i64: 8, 128>}]} {
    %c0 = arith.constant 0 : index
    %c0_0 = arith.constant 0 : index
    %0 = vector.load %arg1[%c0, %c0_0] : memref<8x128xf32, #tpu.memory_space<vmem>>, vector<8x128xf32>
    %cst = arith.constant 1.000000e+00 : f32
    %1 = vector.broadcast %cst : f32 to vector<8x128xf32>
    %2 = arith.addf %0, %1 : vector<8x128xf32>
    %c0_1 = arith.constant 0 : index
    %c0_2 = arith.constant 0 : index
    %3 = vector.load %arg2[%c0_1, %c0_2] : memref<8x128xf32, #tpu.memory_space<vmem>>, vector<8x128xf32>
    tpu.vector_store %arg2[%c0_1, %c0_2], %2 {strides = array<i32>} : memref<8x128xf32, #tpu.memory_space<vmem>>, vector<8x128xf32>,
    return
  }
  func.func @transform_0(%arg0: i32) -> (i32, i32) {
    %c0_i32 = arith.constant 0 : i32
    %c0_i32_0 = arith.constant 0 : i32
    %c0_i32_1 = arith.constant 0 : i32
    return %c0_i32, %c0_i32_0 : i32, i32
  }
  func.func @transform_1(%arg0: i32) -> (i32, i32) {
    %c0_i32 = arith.constant 0 : i32
    %c0_i32_0 = arith.constant 0 : i32
    %c0_i32_1 = arith.constant 0 : i32
    return %c0_i32, %c0_i32_0 : i32, i32
  }
}

module attributes {stable_mosaic.version = 11 : i64} {
  func.func @mlp_kernel(%arg0: i32, %arg1: memref<8x32xf32, #tpu.memory_space<vmem>>, %arg2: memref<32x64xf32, #tpu.memory_space<vmem>>, %arg3: memref<1x64xf32, #tpu.memory_space<vmem>>, %arg4: memref<64x32xf32, #tpu.memory_space<vmem>>, %arg5: memref<1x32xf32, #tpu.memory_space<vmem>>, %arg6: memref<8x32xf32, #tpu.memory_space<vmem>>, %arg7: memref<8x32xf32, #tpu.memory_space<vmem>>) attributes {dimension_semantics = [#tpu.dimension_semantics<parallel>], iteration_bounds = array<i64: 2>, scalar_prefetch = 0 : i64, scratch_operands = 1 : i64, tpu.core_type = #tpu.core_type<tc>, window_params = [{transform_indices = @transform_0, window_bounds = array<i64: 8, 32>}, {pipeline_mode = #tpu.pipeline_mode<synchronous>, transform_indices = @transform_1, window_bounds = array<i64: 32, 64>}, {pipeline_mode = #tpu.pipeline_mode<synchronous>, transform_indices = @transform_2, window_bounds = array<i64: 1, 64>}, {pipeline_mode = #tpu.pipeline_mode<synchronous>, transform_indices = @transform_3, window_bounds = array<i64: 64, 32>}, {pipeline_mode = #tpu.pipeline_mode<synchronous>, transform_indices = @transform_4, window_bounds = array<i64: 1, 32>}, {transform_indices = @transform_5, window_bounds = array<i64: 8, 32>}]} {
    %c0 = arith.constant 0 : index
    %c0_0 = arith.constant 0 : index
    %0 = vector.load %arg1[%c0, %c0_0] : memref<8x32xf32, #tpu.memory_space<vmem>>, vector<8x32xf32>
    %c0_1 = arith.constant 0 : index
    %c0_2 = arith.constant 0 : index
    %1 = vector.load %arg2[%c0_1, %c0_2] : memref<32x64xf32, #tpu.memory_space<vmem>>, vector<32x64xf32>
    %c0_3 = arith.constant 0 : index
    %c0_4 = arith.constant 0 : index
    %2 = vector.load %arg3[%c0_3, %c0_4] : memref<1x64xf32, #tpu.memory_space<vmem>>, vector<1x64xf32>
    %c0_5 = arith.constant 0 : index
    %c0_6 = arith.constant 0 : index
    %3 = vector.load %arg4[%c0_5, %c0_6] : memref<64x32xf32, #tpu.memory_space<vmem>>, vector<64x32xf32>
    %cst = arith.constant dense<0.000000e+00> : vector<8x64xf32>
    %4 = tpu.matmul %0, %1, %cst {dimension_numbers = #tpu.dot_dimension_numbers<[1], [0], [0], [1], [0, 0, 1, 1], [], []>} : vector<8x32xf32>, vector<32x64xf32>, vector<8x64xf32> -> vector<8x64xf32>
    %5 = vector.broadcast %2 : vector<1x64xf32> to vector<8x64xf32>
    %6 = arith.addf %4, %5 : vector<8x64xf32>
    %cst_7 = arith.constant 5.000000e-01 : f32
    %7 = vector.broadcast %cst_7 : f32 to vector<8x64xf32>
    %8 = arith.mulf %6, %7 : vector<8x64xf32>
    %cst_8 = arith.constant 0.707106769 : f32
    %9 = vector.broadcast %cst_8 : f32 to vector<8x64xf32>
    %10 = arith.mulf %6, %9 : vector<8x64xf32>
    %11 = math.erf %10 : vector<8x64xf32>
    %cst_9 = arith.constant 1.000000e+00 : f32
    %12 = vector.broadcast %cst_9 : f32 to vector<8x64xf32>
    %13 = arith.addf %12, %11 : vector<8x64xf32>
    %14 = arith.mulf %8, %13 : vector<8x64xf32>
    %cst_10 = arith.constant dense<0.000000e+00> : vector<8x32xf32>
    %15 = tpu.matmul %14, %3, %cst_10 {dimension_numbers = #tpu.dot_dimension_numbers<[1], [0], [0], [1], [0, 0, 1, 1], [], []>} : vector<8x64xf32>, vector<64x32xf32>, vector<8x32xf32> -> vector<8x32xf32>
    %c0_11 = arith.constant 0 : index
    %c0_12 = arith.constant 0 : index
    %16 = vector.load %arg5[%c0_11, %c0_12] : memref<1x32xf32, #tpu.memory_space<vmem>>, vector<1x32xf32>
    %17 = vector.broadcast %16 : vector<1x32xf32> to vector<8x32xf32>
    %18 = arith.addf %15, %17 : vector<8x32xf32>
    %c0_13 = arith.constant 0 : index
    %c0_14 = arith.constant 0 : index
    %19 = vector.load %arg6[%c0_13, %c0_14] : memref<8x32xf32, #tpu.memory_space<vmem>>, vector<8x32xf32>
    tpu.vector_store %arg6[%c0_13, %c0_14], %18 {strides = array<i32>} : memref<8x32xf32, #tpu.memory_space<vmem>>, vector<8x32xf32>,
    return
  }
  func.func @transform_0(%arg0: i32) -> (i32, i32) {
    %c0_i32 = arith.constant 0 : i32
    %c0_i32_0 = arith.constant 0 : i32
    return %arg0, %c0_i32 : i32, i32
  }
  func.func @transform_1(%arg0: i32) -> (i32, i32) {
    %c0_i32 = arith.constant 0 : i32
    %c0_i32_0 = arith.constant 0 : i32
    %c0_i32_1 = arith.constant 0 : i32
    return %c0_i32, %c0_i32_0 : i32, i32
  }
  func.func @transform_2(%arg0: i32) -> (i32, i32) {
    %c0_i32 = arith.constant 0 : i32
    %c0_i32_0 = arith.constant 0 : i32
    %c0_i32_1 = arith.constant 0 : i32
    return %c0_i32, %c0_i32_0 : i32, i32
  }
  func.func @transform_3(%arg0: i32) -> (i32, i32) {
    %c0_i32 = arith.constant 0 : i32
    %c0_i32_0 = arith.constant 0 : i32
    %c0_i32_1 = arith.constant 0 : i32
    return %c0_i32, %c0_i32_0 : i32, i32
  }
  func.func @transform_4(%arg0: i32) -> (i32, i32) {
    %c0_i32 = arith.constant 0 : i32
    %c0_i32_0 = arith.constant 0 : i32
    %c0_i32_1 = arith.constant 0 : i32
    return %c0_i32, %c0_i32_0 : i32, i32
  }
  func.func @transform_5(%arg0: i32) -> (i32, i32) {
    %c0_i32 = arith.constant 0 : i32
    %c0_i32_0 = arith.constant 0 : i32
    return %arg0, %c0_i32 : i32, i32
  }
}

</mosaic_0001>

<llo_original>
// kernel: tpu_custom_call.1
$region0: #{tpu_custom_call.1}
  #allocation0 [shape = 'u32[]', space=smem, size = 0x4, offset = 0x4, fixed_abs, tag = 'smem constant byte address 0x4 - core index']
  #allocation1 [shape = 'u32[144,128]{1,0:T(1,128)}', space=vmem, size = 0x12000, scoped, tag = 'internal scratch']
  %s0 = inlined_call_operand.hbm [shape: f32[8,128], index: 0, kind: input, shape index: {}]
  %s1 = inlined_call_operand.hbm [shape: f32[8,128], index: 1, kind: output, shape index: {}]
  %s2 = sld [smem:[#allocation0]]
  $region18: #{tpu_custom_call.1} parent=0
    _
  %s4 = ssub.s32 1, %s2
  %s5 = scalar_select 0, %s4, %s2
  $region1: #{tpu_custom_call.1} parent=0
    #allocation2 [shape = 'u8[4096]{0}', space=vmem, size = 0x1000, scoped, tag = 'input window, operand 0, single buffered']
    #allocation3 [shape = 's32[1]{0}', space=sflag, size = 0x4, scoped, tag = 'scoped memory for tpu_custom_call.1']
    #allocation4 [shape = 's32[1]{0}', space=sflag, size = 0x4, scoped, tag = 'scoped memory for tpu_custom_call.1']
    #allocation5 [shape = 'u8[4096]{0}', space=vmem, size = 0x1000, scoped, tag = 'output window, operand 0, single buffered']
    %6 = vsyncpa [#allocation3], 0
    %7 = vsyncpa [#allocation4], 0
    // Predicated region
    $region2: #{tpu_custom_call.1} parent=1 // pred_check
      _
    $region3: #{tpu_custom_call.1} parent=1 // pred_check_branch
      %9 = sbr.rel (0) target = $region5
    $region4: #{tpu_custom_call.1} parent=1 // pred_region
      %s11 = ssub.s32 128, 128
      %12 = vsyncadd [#allocation3], %s11
      %s14 = sshll.u32 [#allocation2], 4
      %s15 = int_to_ptr.vmem [resolvable:$true] %s14
      %17 = dma.hbm_to_vmem [thread:$0]  %s0, 128, %s15, [#allocation3]
    $region5: #{tpu_custom_call.1} parent=1 // pred_fallthru
      _
    // Predicated region
    $region6: #{tpu_custom_call.1} parent=1 // pred_check
      _
    $region7: #{tpu_custom_call.1} parent=1 // pred_check_branch
      %19 = sbr.rel (0) target = $region9
    $region8: #{tpu_custom_call.1} parent=1 // pred_region
      %20 = dma.done [#allocation3], 128
    $region9: #{tpu_custom_call.1} parent=1 // pred_fallthru
      _
    %v21 = vld [vmem:[#allocation2] sm:$0xff]
    %v22 = vadd.f32 %v21, 1.0
    %23 = vst [vmem:[#allocation5] sm:$0xff] %v22
    // Predicated region
    $region10: #{tpu_custom_call.1} parent=1 // pred_check
      _
    $region11: #{tpu_custom_call.1} parent=1 // pred_check_branch
      %25 = sbr.rel (0) target = $region13
    $region12: #{tpu_custom_call.1} parent=1 // pred_region
      %s27 = ssub.s32 128, 128
      %28 = vsyncadd [#allocation4], %s27
      %s30 = sshll.u32 [#allocation5], 4
      %s31 = int_to_ptr.vmem [resolvable:$true] %s30
      %33 = dma.vmem_to_hbm [thread:$0]  %s31, 128, %s1, [#allocation4]
    $region13: #{tpu_custom_call.1} parent=1 // pred_fallthru
      _
    // Predicated region
    $region14: #{tpu_custom_call.1} parent=1 // pred_check
      _
    $region15: #{tpu_custom_call.1} parent=1 // pred_check_branch
      %35 = sbr.rel (0) target = $region17
    $region16: #{tpu_custom_call.1} parent=1 // pred_region
      %36 = dma.done [#allocation4], 128
    $region17: #{tpu_custom_call.1} parent=1 // pred_fallthru
      _
    %37 = vsyncpa [#allocation3], 1
    %38 = vsyncpa [#allocation4], 1

// kernel: tpu_custom_call.1
$region0: #{tpu_custom_call.1}
  #allocation0 [shape = 'u32[]', space=smem, size = 0x4, offset = 0x4, fixed_abs, tag = 'smem constant byte address 0x4 - core index']
  #allocation1 [shape = 'u32[144,128]{1,0:T(1,128)}', space=vmem, size = 0x12000, scoped, tag = 'internal scratch']
  #allocation2 [shape = 'f32[8,32]{1,0:T(8,128)}', space=vmem, size = 0x1000, scoped, tag = 'scratch operand']
  %s0 = inlined_call_operand.vmem [shape: f32[16,32], index: 0, kind: input, shape index: {}]
  %s1 = inlined_call_operand.vmem [shape: f32[32,64], index: 1, kind: input, shape index: {}]
  %s2 = inlined_call_operand.vmem [shape: f32[1,64], index: 2, kind: input, shape index: {}]
  %s3 = inlined_call_operand.vmem [shape: f32[64,32], index: 3, kind: input, shape index: {}]
  %s4 = inlined_call_operand.vmem [shape: f32[1,32], index: 4, kind: input, shape index: {}]
  %s5 = inlined_call_operand.hbm [shape: f32[16,32], index: 5, kind: output, shape index: {}]
  %s6 = sld [smem:[#allocation0]]
  $region53: #{tpu_custom_call.1} parent=0
    _
  %s8 = ssub.s32 1, %s6
  %s9 = scalar_select 0, %s8, %s6
  $region1: #{tpu_custom_call.1} parent=0
    #allocation3 [shape = 'u8[8192]{0}', space=vmem, size = 0x2000, scoped, tag = 'output window, operand 0']
    #allocation4 [shape = 's32[2]{0}', space=sflag, size = 0x8, scoped, tag = 'scoped memory for tpu_custom_call.1']
    %10 = vsyncpa [#allocation4], 0
    %s11 = scalar_lea.sflag [#allocation4], 1
    %12 = vsyncpa %s11, 0
    loop: start=0, step=1, limit=4
    $region2: #{tpu_custom_call.1} parent=1 // loop_pre_header
      _
    $region3: #{tpu_custom_call.1} parent=1 // loop_header
      %s14 = sphi 0, %s18
      %p15 = scmp.ge.s32.totalorder %s14, 4
      %s24 = sphi 0, %s26
      %s27 = sphi 0, %s24
      %s28 = sphi 0, %s27
      %s44 = sphi 0, %s28
      %s48 = sphi 0, %s48
      %s50 = sphi 0, %s48
      %s51 = sphi 0, %s50
      %s65 = sphi 0, %s51
      %s69 = sphi 0, %s69
      %s71 = sphi 0, %s69
      %s72 = sphi 0, %s71
      %s86 = sphi 0, %s72
      %s90 = sphi 0, %s90
      %s92 = sphi 0, %s90
      %s93 = sphi 0, %s92
      %s107 = sphi 0, %s93
      %s111 = sphi 0, %s111
      %s113 = sphi 0, %s111
      %s114 = sphi 0, %s113
      %s128 = sphi 0, %s114
      %s134 = sphi 0, %s136
      %s137 = sphi 0, %s134
      %s138 = sphi 0, %s137
      %s154 = sphi 0, %s138
    $region4: #{tpu_custom_call.1} parent=1 // loop_header_branch
      %17 = sbr.rel (%p15) target = $region8
    $region5: #{tpu_custom_call.1} parent=1 // loop_body
      %s19 = ssub.s32 %s14, 1
      %s20 = ssub.s32 %s14, 2
      %s21 = sadd.s32 %s14, 1
      %s22 = ssub.s32 %s14, %s21
      %p23 = scmp.eq.s32.totalorder %s22, 0
      %s25 = sadd.s32 %s24, 1
      %s26 = scalar_select %p23, %s24, %s25
      %p29 = pneg %p23
      %p30 = scmp.eq.s32.totalorder %s14, 1
      %p31 = por %p29, %p30
      %p32 = scmp.ne.s32.totalorder %s24, %s27
      %p33 = scmp.eq.s32.totalorder %s14, 0
      %p34 = por %p32, %p33
      %p35 = scmp.ne.s32.totalorder %s24, %s27
      %p36 = scmp.eq.s32.totalorder %s19, 1
      %p37 = por %p35, %p36
      %p38 = scmp.ne.s32.totalorder %s27, %s28
      %p39 = scmp.eq.s32.totalorder %s19, 0
      %p40 = por %p38, %p39
      %p41 = scmp.ne.s32.totalorder %s27, %s28
      %p42 = scmp.eq.s32.totalorder %s20, 1
      %p43 = por %p41, %p42
      %p45 = scmp.ne.s32.totalorder %s28, %s44
      %p46 = scmp.eq.s32.totalorder %s20, 0
      %p47 = por %p45, %p46
      %s49 = sadd.s32 %s48, 1
      %p52 = scmp.eq.s32.totalorder %s14, 1
      %p53 = scmp.ne.s32.totalorder %s48, %s50
      %p54 = scmp.eq.s32.totalorder %s14, 0
      %p55 = por %p53, %p54
      %p56 = scmp.ne.s32.totalorder %s48, %s50
      %p57 = scmp.eq.s32.totalorder %s19, 1
      %p58 = por %p56, %p57
      %p59 = scmp.ne.s32.totalorder %s50, %s51
      %p60 = scmp.eq.s32.totalorder %s19, 0
      %p61 = por %p59, %p60
      %p62 = scmp.ne.s32.totalorder %s50, %s51
      %p63 = scmp.eq.s32.totalorder %s20, 1
      %p64 = por %p62, %p63
      %p66 = scmp.ne.s32.totalorder %s51, %s65
      %p67 = scmp.eq.s32.totalorder %s20, 0
      %p68 = por %p66, %p67
      %s70 = sadd.s32 %s69, 1
      %p73 = scmp.eq.s32.totalorder %s14, 1
      %p74 = scmp.ne.s32.totalorder %s69, %s71
      %p75 = scmp.eq.s32.totalorder %s14, 0
      %p76 = por %p74, %p75
      %p77 = scmp.ne.s32.totalorder %s69, %s71
      %p78 = scmp.eq.s32.totalorder %s19, 1
      %p79 = por %p77, %p78
      %p80 = scmp.ne.s32.totalorder %s71, %s72
      %p81 = scmp.eq.s32.totalorder %s19, 0
      %p82 = por %p80, %p81
      %p83 = scmp.ne.s32.totalorder %s71, %s72
      %p84 = scmp.eq.s32.totalorder %s20, 1
      %p85 = por %p83, %p84
      %p87 = scmp.ne.s32.totalorder %s72, %s86
      %p88 = scmp.eq.s32.totalorder %s20, 0
      %p89 = por %p87, %p88
      %s91 = sadd.s32 %s90, 1
      %p94 = scmp.eq.s32.totalorder %s14, 1
      %p95 = scmp.ne.s32.totalorder %s90, %s92
      %p96 = scmp.eq.s32.totalorder %s14, 0
      %p97 = por %p95, %p96
      %p98 = scmp.ne.s32.totalorder %s90, %s92
      %p99 = scmp.eq.s32.totalorder %s19, 1
      %p100 = por %p98, %p99
      %p101 = scmp.ne.s32.totalorder %s92, %s93
      %p102 = scmp.eq.s32.totalorder %s19, 0
      %p103 = por %p101, %p102
      %p104 = scmp.ne.s32.totalorder %s92, %s93
      %p105 = scmp.eq.s32.totalorder %s20, 1
      %p106 = por %p104, %p105
      %p108 = scmp.ne.s32.totalorder %s93, %s107
      %p109 = scmp.eq.s32.totalorder %s20, 0
      %p110 = por %p108, %p109
      %s112 = sadd.s32 %s111, 1
      %p115 = scmp.eq.s32.totalorder %s14, 1
      %p116 = scmp.ne.s32.totalorder %s111, %s113
      %p117 = scmp.eq.s32.totalorder %s14, 0
      %p118 = por %p116, %p117
      %p119 = scmp.ne.s32.totalorder %s111, %s113
      %p120 = scmp.eq.s32.totalorder %s19, 1
      %p121 = por %p119, %p120
      %p122 = scmp.ne.s32.totalorder %s113, %s114
      %p123 = scmp.eq.s32.totalorder %s19, 0
      %p124 = por %p122, %p123
      %p125 = scmp.ne.s32.totalorder %s113, %s114
      %p126 = scmp.eq.s32.totalorder %s20, 1
      %p127 = por %p125, %p126
      %p129 = scmp.ne.s32.totalorder %s114, %s128
      %p130 = scmp.eq.s32.totalorder %s20, 0
      %p131 = por %p129, %p130
      %s132 = ssub.s32 %s14, %s21
      %p133 = scmp.eq.s32.totalorder %s132, 0
      %s135 = sadd.s32 %s134, 1
      %s136 = scalar_select %p133, %s134, %s135
      %p139 = pneg %p133
      %p140 = scmp.eq.s32.totalorder %s14, 1
      %p141 = por %p139, %p140
      %p142 = scmp.ne.s32.totalorder %s134, %s137
      %p143 = scmp.eq.s32.totalorder %s14, 0
      %p144 = por %p142, %p143
      %p145 = scmp.ne.s32.totalorder %s134, %s137
      %p146 = scmp.eq.s32.totalorder %s19, 1
      %p147 = por %p145, %p146
      %p148 = scmp.ne.s32.totalorder %s137, %s138
      %p149 = scmp.eq.s32.totalorder %s19, 0
      %p150 = por %p148, %p149
      %p151 = scmp.ne.s32.totalorder %s137, %s138
      %p152 = scmp.eq.s32.totalorder %s20, 1
      %p153 = por %p151, %p152
      %p155 = scmp.ne.s32.totalorder %s138, %s154
      %p156 = scmp.eq.s32.totalorder %s20, 0
      %p157 = por %p155, %p156
      %p158 = scmp.le.s32.totalorder 1, %s14
      %p159 = scmp.lt.s32.totalorder %s14, 3
      %p160 = pnand %p158, %p159
      %p161 = pneg %p160
      // Predicated region
      $region9: #{tpu_custom_call.1} parent=5 // pred_check
        _
      $region10: #{tpu_custom_call.1} parent=5 // pred_check_branch
        %163 = sbr.rel (%p160) target = $region12
      $region11: #{tpu_custom_call.1} parent=5 // pred_region
        %s164 = ssub.s32 %s14, 1
        // Predicated region
        $region13: #{tpu_custom_call.1} parent=11 // pred_check
          %p165 = pneg %p61
        $region14: #{tpu_custom_call.1} parent=11 // pred_check_branch
          %167 = sbr.rel (%p165) target = $region16
        $region15: #{tpu_custom_call.1} parent=11 // pred_region
          _
        $region16: #{tpu_custom_call.1} parent=11 // pred_fallthru
          _
        // Predicated region
        $region17: #{tpu_custom_call.1} parent=11 // pred_check
          %p168 = pneg %p82
        $region18: #{tpu_custom_call.1} parent=11 // pred_check_branch
          %170 = sbr.rel (%p168) target = $region20
        $region19: #{tpu_custom_call.1} parent=11 // pred_region
          _
        $region20: #{tpu_custom_call.1} parent=11 // pred_fallthru
          _
        // Predicated region
        $region21: #{tpu_custom_call.1} parent=11 // pred_check
          %p171 = pneg %p103
        $region22: #{tpu_custom_call.1} parent=11 // pred_check_branch
          %173 = sbr.rel (%p171) target = $region24
        $region23: #{tpu_custom_call.1} parent=11 // pred_region
          _
        $region24: #{tpu_custom_call.1} parent=11 // pred_fallthru
          _
        // Predicated region
        $region25: #{tpu_custom_call.1} parent=11 // pred_check
          %p174 = pneg %p124
        $region26: #{tpu_custom_call.1} parent=11 // pred_check_branch
          %176 = sbr.rel (%p174) target = $region28
        $region27: #{tpu_custom_call.1} parent=11 // pred_region
          _
        $region28: #{tpu_custom_call.1} parent=11 // pred_fallthru
          _
      $region12: #{tpu_custom_call.1} parent=5 // pred_fallthru
        _
      %p177 = scmp.lt.s32.totalorder %s14, 2
      // Predicated region
      $region29: #{tpu_custom_call.1} parent=5 // pred_check
        %p178 = pneg %p177
      $region30: #{tpu_custom_call.1} parent=5 // pred_check_branch
        %180 = sbr.rel (%p178) target = $region32
      $region31: #{tpu_custom_call.1} parent=5 // pred_region
        // Predicated region
        $region33: #{tpu_custom_call.1} parent=31 // pred_check
          %p181 = pneg %p34
        $region34: #{tpu_custom_call.1} parent=31 // pred_check_branch
          %183 = sbr.rel (%p181) target = $region36
        $region35: #{tpu_custom_call.1} parent=31 // pred_region
          %p184 = scmp.lt.s32.totalorder %s14, 1
          %s185 = scalar_select %p184, %s14, 1
          %s186 = smul.addr %s185, 8
          %s187 = scalar_lea.vmem %s0, %s186
        $region36: #{tpu_custom_call.1} parent=31 // pred_fallthru
          _
      $region32: #{tpu_custom_call.1} parent=5 // pred_fallthru
        _
      %p188 = scmp.le.s32.totalorder 1, %s14
      %p189 = scmp.lt.s32.totalorder %s14, 3
      %p190 = pnand %p188, %p189
      %p191 = pneg %p190
      // Predicated region
      $region37: #{tpu_custom_call.1} parent=5 // pred_check
        _
      $region38: #{tpu_custom_call.1} parent=5 // pred_check_branch
        %193 = sbr.rel (%p190) target = $region40
      $region39: #{tpu_custom_call.1} parent=5 // pred_region
        %s194 = ssub.s32 %s14, 1
        %p195 = scmp.lt.s32.totalorder %s19, 1
        %s196 = scalar_select %p195, %s19, 1
        %s197 = smul.addr %s196, 8
        %s198 = scalar_lea.vmem %s0, %s197
        %p199 = pneg %p40
        %p200 = pneg %p37
        %p201 = pneg %p61
        %p202 = pneg %p58
        %p203 = pneg %p82
        %p204 = pneg %p79
        %p205 = pneg %p103
        %p206 = pneg %p100
        %p207 = pneg %p124
        %p208 = pneg %p121
        %p209 = pneg %p150
        %p210 = pneg %p147
        %s211 = sand.u32 %s137, 1
        %s212 = scalar_lea.sflag [#allocation4], %s211
        %s213 = sand.u32 %s137, 1
        %s214 = smul.addr %s213, 8
        %s215 = scalar_lea.vmem [#allocation3], %s214
        %p216 = scmp.lt.s32.totalorder %s19, 1
        %s217 = scalar_select %p216, %s19, 1
        %s218 = smul.addr %s217, 8
        %s219 = scalar_lea.vmem %s0, %s218
        %v220 = vld [vmem:[%s219] sm:$0xff]
        %v221 = vld [vmem:[%s1] sm:$0xff]
        %v222 = vld [vmem:[%s1 + $0x8] sm:$0xff]
        %v223 = vld [vmem:[%s1 + $0x10] sm:$0xff]
        %v224 = vld [vmem:[%s1 + $0x18] sm:$0xff]
        %v225 = vld [vmem:[%s2] sm:$0x1]
        %v226 = vld [vmem:[%s3] sm:$0xff]
        %v227 = vld [vmem:[%s3 + $0x8] sm:$0xff]
        %v228 = vld [vmem:[%s3 + $0x10] sm:$0xff]
        %v229 = vld [vmem:[%s3 + $0x18] sm:$0xff]
        %v230 = vld [vmem:[%s3 + $0x20] sm:$0xff]
        %v231 = vld [vmem:[%s3 + $0x28] sm:$0xff]
        %v232 = vld [vmem:[%s3 + $0x30] sm:$0xff]
        %v233 = vld [vmem:[%s3 + $0x38] sm:$0xff]
        %v235 = vlaneseq
        %v236 = vshrl.u32 %v235, 7
        %v237 = vsub.s32 0, %v236
        %v238 = vrot.slane %v225, %v237
        %vm240 = vcmask 261120
        %v242 = vsel %vm240, %v220, 0
        %244 = vmatprep.subr.mxu0 0.0
        %245 = vmatpush1.msra.mxu0 %v221
        %246 = vmatprep.subr.mxu0 0.0
        %247 = vmatpush1.msra.mxu0 %v222
        %248 = vmatprep.subr.mxu0 0.0
        %249 = vmatpush1.msra.mxu0 %v223
        %250 = vmatprep.subr.mxu0 0.0
        %251 = vmatpush1.msra.mxu0 %v224
        %252 = vmatprep.subr.mxu0 0.0
        %253 = vmatpush1.msra.mxu0 0.0
        %254 = vmatprep.subr.mxu0 0.0
        %255 = vmatpush1.msra.mxu0 0.0
        %256 = vmatprep.subr.mxu0 0.0
        %257 = vmatpush1.msra.mxu0 0.0
        %258 = vmatprep.subr.mxu0 0.0
        %259 = vmatpush1.msra.mxu0 0.0
        %260 = vmatprep.subr.mxu0 0.0
        %261 = vmatpush1.msra.mxu0 0.0
        %262 = vmatprep.subr.mxu0 0.0
        %263 = vmatpush1.msra.mxu0 0.0
        %264 = vmatprep.subr.mxu0 0.0
        %265 = vmatpush1.msra.mxu0 0.0
        %266 = vmatprep.subr.mxu0 0.0
        %267 = vmatpush1.msra.mxu0 0.0
        %268 = vmatprep.subr.mxu0 0.0
        %269 = vmatpush1.msra.mxu0 0.0
        %270 = vmatprep.subr.mxu0 0.0
        %271 = vmatpush1.msra.mxu0 0.0
        %272 = vmatprep.subr.mxu0 0.0
        %273 = vmatpush1.msra.mxu0 0.0
        %274 = vmatprep.subr.mxu0 0.0
        %275 = vmatpush1.msra.mxu0 0.0
        %276 = vmatprep.subr.mxu0 0.0
        %277 = vmatpush1.msra.mxu0 0.0
        %278 = vmatprep.subr.mxu0 0.0
        %279 = vmatpush1.msra.mxu0 0.0
        %280 = vmatprep.subr.mxu0 0.0
        %281 = vmatpush1.msra.mxu0 0.0
        %282 = vmatprep.subr.mxu0 0.0
        %283 = vmatpush1.msra.mxu0 0.0
        %284 = vmatprep.subr.mxu0 0.0
        %285 = vmatpush1.msra.mxu0 0.0
        %286 = vmatprep.subr.mxu0 0.0
        %287 = vmatpush1.msra.mxu0 0.0
        %288 = vmatprep.subr.mxu0 0.0
        %289 = vmatpush1.msra.mxu0 0.0
        %290 = vmatprep.subr.mxu0 0.0
        %291 = vmatpush1.msra.mxu0 0.0
        %292 = vmatprep.subr.mxu0 0.0
        %293 = vmatpush1.msra.mxu0 0.0
        %294 = vmatprep.subr.mxu0 0.0
        %295 = vmatpush1.msra.mxu0 0.0
        %296 = vmatprep.subr.mxu0 0.0
        %297 = vmatpush1.msra.mxu0 0.0
        %298 = vmatprep.subr.mxu0 0.0
        %299 = vmatpush1.msra.mxu0 0.0
        %300 = vmatprep.subr.mxu0 0.0
        %301 = vmatpush1.msra.mxu0 0.0
        %302 = vmatprep.subr.mxu0 0.0
        %303 = vmatpush1.msra.mxu0 0.0
        %304 = vmatprep.subr.mxu0 0.0
        %305 = vmatpush1.msra.mxu0 0.0
        %306 = vmatprep.subr.mxu0 0.0
        %307 = vmatpush1.msra.mxu0 0.0
        %308 = vmatprep.mubr.f32.mxu0 0.0
        %309 = vmatmul.mubr.f32.gmra.mrb[0].mxu0 %v242
        %v310 = vpop.f32.mrb[0].mxu0
        %v311 = vadd.f32 %v238, %v310
        %v312 = vpop.f32.mrb[0].mxu0
        %313 = vdwg.mxu0
        %v314 = vmul.f32 %v311, 0.5
        %v315 = vmul.f32 %v311, 0.70710677
        %v316 = verf.f32.pop %v315
        %v317 = vadd.f32 %v316, 1.0
        %v318 = vmul.f32 %v314, %v317
        %v319 = vld [vmem:[%s4] sm:$0x1]
        %v321 = vlaneseq
        %v322 = vshrl.u32 %v321, 7
        %v323 = vsub.s32 0, %v322
        %v324 = vrot.slane %v319, %v323
        %vm326 = vcmask 523264
        %v328 = vsel %vm326, %v318, 0
        %330 = vmatprep.subr.mxu0 0.0
        %331 = vmatpush1.msra.mxu0 %v226
        %332 = vmatprep.subr.mxu0 0.0
        %333 = vmatpush1.msra.mxu0 %v227
        %334 = vmatprep.subr.mxu0 0.0
        %335 = vmatpush1.msra.mxu0 %v228
        %336 = vmatprep.subr.mxu0 0.0
        %337 = vmatpush1.msra.mxu0 %v229
        %338 = vmatprep.subr.mxu0 0.0
        %339 = vmatpush1.msra.mxu0 %v230
        %340 = vmatprep.subr.mxu0 0.0
        %341 = vmatpush1.msra.mxu0 %v231
        %342 = vmatprep.subr.mxu0 0.0
        %343 = vmatpush1.msra.mxu0 %v232
        %344 = vmatprep.subr.mxu0 0.0
        %345 = vmatpush1.msra.mxu0 %v233
        %346 = vmatprep.subr.mxu0 0.0
        %347 = vmatpush1.msra.mxu0 0.0
        %348 = vmatprep.subr.mxu0 0.0
        %349 = vmatpush1.msra.mxu0 0.0
        %350 = vmatprep.subr.mxu0 0.0
        %351 = vmatpush1.msra.mxu0 0.0
        %352 = vmatprep.subr.mxu0 0.0
        %353 = vmatpush1.msra.mxu0 0.0
        %354 = vmatprep.subr.mxu0 0.0
        %355 = vmatpush1.msra.mxu0 0.0
        %356 = vmatprep.subr.mxu0 0.0
        %357 = vmatpush1.msra.mxu0 0.0
        %358 = vmatprep.subr.mxu0 0.0
        %359 = vmatpush1.msra.mxu0 0.0
        %360 = vmatprep.subr.mxu0 0.0
        %361 = vmatpush1.msra.mxu0 0.0
        %362 = vmatprep.subr.mxu0 0.0
        %363 = vmatpush1.msra.mxu0 0.0
        %364 = vmatprep.subr.mxu0 0.0
        %365 = vmatpush1.msra.mxu0 0.0
        %366 = vmatprep.subr.mxu0 0.0
        %367 = vmatpush1.msra.mxu0 0.0
        %368 = vmatprep.subr.mxu0 0.0
        %369 = vmatpush1.msra.mxu0 0.0
        %370 = vmatprep.subr.mxu0 0.0
        %371 = vmatpush1.msra.mxu0 0.0
        %372 = vmatprep.subr.mxu0 0.0
        %373 = vmatpush1.msra.mxu0 0.0
        %374 = vmatprep.subr.mxu0 0.0
        %375 = vmatpush1.msra.mxu0 0.0
        %376 = vmatprep.subr.mxu0 0.0
        %377 = vmatpush1.msra.mxu0 0.0
        %378 = vmatprep.subr.mxu0 0.0
        %379 = vmatpush1.msra.mxu0 0.0
        %380 = vmatprep.subr.mxu0 0.0
        %381 = vmatpush1.msra.mxu0 0.0
        %382 = vmatprep.subr.mxu0 0.0
        %383 = vmatpush1.msra.mxu0 0.0
        %384 = vmatprep.subr.mxu0 0.0
        %385 = vmatpush1.msra.mxu0 0.0
        %386 = vmatprep.subr.mxu0 0.0
        %387 = vmatpush1.msra.mxu0 0.0
        %388 = vmatprep.subr.mxu0 0.0
        %389 = vmatpush1.msra.mxu0 0.0
        %390 = vmatprep.subr.mxu0 0.0
        %391 = vmatpush1.msra.mxu0 0.0
        %392 = vmatprep.subr.mxu0 0.0
        %393 = vmatpush1.msra.mxu0 0.0
        %394 = vmatprep.mubr.f32.mxu0 0.0
        %395 = vmatmul.mubr.f32.gmra.mrb[0].mxu0 %v328
        %v396 = vpop.f32.mrb[0].mxu0
        %v397 = vadd.f32 %v324, %v396
        %v398 = vpop.f32.mrb[0].mxu0
        %399 = vdwg.mxu0
        %400 = vst.msk [vmem:[%s215] sm:$0xff] %vm240, %v397
        %s401 = sand.u32 %s137, 1
        %s402 = scalar_lea.sflag [#allocation4], %s401
        %s403 = sand.u32 %s137, 1
        %s404 = smul.addr %s403, 8
        %s405 = scalar_lea.vmem [#allocation3], %s404
        // Predicated region
        $region41: #{tpu_custom_call.1} parent=39 // pred_check
          %p406 = pneg %p147
        $region42: #{tpu_custom_call.1} parent=39 // pred_check_branch
          %408 = sbr.rel (%p406) target = $region44
        $region43: #{tpu_custom_call.1} parent=39 // pred_region
          %s410 = ssub.s32 128, 128
          %411 = vsyncadd %s402, %s410
          %s412 = smul.addr %s19, 128
          %s413 = scalar_lea.hbm %s5, %s412
          %s415 = sshll.u32 %s405, 4
          %s416 = int_to_ptr.vmem [resolvable:$true] %s415
          %418 = dma.vmem_to_hbm [thread:$0]  %s416, 128, %s413, %s402
        $region44: #{tpu_custom_call.1} parent=39 // pred_fallthru
          _
      $region40: #{tpu_custom_call.1} parent=5 // pred_fallthru
        _
      %p419 = scmp.le.s32.totalorder 2, %s14
      // Predicated region
      $region45: #{tpu_custom_call.1} parent=5 // pred_check
        %p420 = pneg %p419
      $region46: #{tpu_custom_call.1} parent=5 // pred_check_branch
        %422 = sbr.rel (%p420) target = $region48
      $region47: #{tpu_custom_call.1} parent=5 // pred_region
        %s423 = ssub.s32 %s14, 2
        // Predicated region
        $region49: #{tpu_custom_call.1} parent=47 // pred_check
          %p424 = pneg %p153
        $region50: #{tpu_custom_call.1} parent=47 // pred_check_branch
          %426 = sbr.rel (%p424) target = $region52
        $region51: #{tpu_custom_call.1} parent=47 // pred_region
          %s427 = sand.u32 %s138, 1
          %s428 = scalar_lea.sflag [#allocation4], %s427
          %s429 = sand.u32 %s138, 1
          %s430 = smul.addr %s429, 8
          %s431 = scalar_lea.vmem [#allocation3], %s430
          %432 = dma.done %s428, 128
        $region52: #{tpu_custom_call.1} parent=47 // pred_fallthru
          _
      $region48: #{tpu_custom_call.1} parent=5 // pred_fallthru
        _
    $region6: #{tpu_custom_call.1} parent=1 // loop_footer
      %s18 = sadd.s32 1, %s14
    $region7: #{tpu_custom_call.1} parent=1 // loop_footer_branch
      %13 = sbr.rel target = $region3
    $region8: #{tpu_custom_call.1} parent=1 // loop_exit
      _
    %433 = vsyncpa [#allocation4], 1
    %s434 = scalar_lea.sflag [#allocation4], 1
    %435 = vsyncpa %s434, 1

</llo_original>
